<compile_context>
chip_gen: v7x
topology: tpu7x:2x2x1
jax: 0.10.0
libtpu: 0.0.40
codegen_flags: <defaults>
</compile_context>

<pallas_src>
import functools

import jax
import jax.numpy as jnp
import numpy as np
from jax.experimental import pallas as pl
from jax.experimental.pallas import tpu as pltpu


# ---------------------------------------------------------------------------
# Pallas kernel: one (head-block, query-block) tile of sparse top-k attention
# ---------------------------------------------------------------------------
def _sparse_topk_attn_kernel(q_ref, k_ref, v_ref, ctx_ref, attn_ref, mask_ref,
                             *, top_k, inv_scale):
    """q_ref: (G, TQ, DK) f32.  k_ref: (G, LK, DK) f32.  v_ref: (G, LK, DV) f32.
       ctx_ref: (G, TQ, DV) f32.  attn_ref: (G, TQ, LK) f32.  mask_ref: int8."""
    # Scale + cast to bf16 in VMEM (MXU operands), accumulate in f32.
    qs = (q_ref[...] * jnp.float32(inv_scale)).astype(jnp.bfloat16)
    ks = k_ref[...].astype(jnp.bfloat16)
    scores = jnp.einsum("gqd,gkd->gqk", qs, ks,
                        preferred_element_type=jnp.float32)        # (G,TQ,LK) f32

    neg_inf = jnp.float32(-jnp.inf)
    # Hoisted row max: first top-k iteration AND softmax max (never masked).
    row_max = jnp.max(scores, axis=-1, keepdims=True)              # XLU

    # ----------------------------------------------------------------------
    # Exact k-th-largest-per-row threshold (torch.topk semantics, duplicates
    # counted).  Each iteration removes one *distinct* value:
    #   m   = current max                         (XLU reduction, reused iter 0)
    #   cnt = #elements equal to m                (XLU row sum)
    #   the iteration where the cumulative count crosses top_k fixes vk.
    # ----------------------------------------------------------------------
    work = scores
    vk = jnp.full(row_max.shape, neg_inf, jnp.float32)
    need = jnp.full(row_max.shape, jnp.float32(top_k), jnp.float32)
    m = row_max
    for it in range(top_k):                      # static unroll, top_k is small
        if it > 0:
            m = jnp.max(work, axis=-1, keepdims=True)                    # XLU
        is_max = work == m
        cnt = jnp.sum(jnp.where(is_max, 1.0, 0.0), axis=-1, keepdims=True)  # XLU
        take = jnp.logical_and(need > 0.0, need <= cnt)
        vk = jnp.where(take, m, vk)
        need = need - cnt
        if it + 1 < top_k:                       # last update is dead, skip it
            work = jnp.where(is_max, neg_inf, work)

    # mask + softmax (f32 element-wise), then context matmul (bf16 MXU operands)
    mask = scores < vk                                                   # bool
    masked = jnp.where(mask, jnp.float32(-1e18), scores)
    e = jnp.exp(masked - row_max)                                        # EUP
    attn = e * pl.reciprocal(jnp.sum(e, axis=-1, keepdims=True), approx=True)

    ctx = jnp.einsum("gqk,gkd->gqd", attn.astype(jnp.bfloat16),
                     v_ref[...].astype(jnp.bfloat16),
                     preferred_element_type=jnp.float32)

    ctx_ref[...] = ctx.astype(ctx_ref.dtype)
    attn_ref[...] = attn.astype(attn_ref.dtype)
    mask_ref[...] = mask.astype(jnp.int8)


# ---------------------------------------------------------------------------
# Per-generation VMEM budget + block-size heuristics
# ---------------------------------------------------------------------------
def _round_up(n, m):
    return ((n + m - 1) // m) * m


def _vmem_capacity_bytes():
    """Physical per-core VMEM (v5e/v6e: 128 MiB, v7x: 64 MiB). Conservative
    fallback of 64 MiB if the query fails."""
    try:
        info = pltpu.get_tpu_info()
        cap = int(getattr(info, "vmem_capacity_bytes"))
        if cap > 0:
            return cap
    except Exception:
        pass
    try:
        kind = jax.devices()[0].device_kind.lower()
        if "v5" in kind or "v6" in kind:
            return 128 * 1024 * 1024
    except Exception:
        pass
    return 64 * 1024 * 1024


def _footprint_bytes(bh, qb, lk, dk, dv, n_temp):
    """Double-buffered f32 in/out blocks + n_temp score-sized f32 temporaries."""
    in_b = bh * qb * dk * 4 + bh * lk * dk * 4 + bh * lk * dv * 4
    out_b = bh * qb * dv * 4 + bh * qb * lk * 4 + bh * qb * lk * 1
    tmp_b = n_temp * bh * qb * lk * 4
    return 2 * (in_b + out_b) + tmp_b


def _choose_tiles(bh_total, lq, lk, dk, dv, budget, n_temp=8):
    """Pick (bh_blk, q_blk) so the per-step footprint fits `budget`.
    Priorities: q_blk as large as possible (>=128 fills the MXU M dim), then
    bh_blk as large as possible, while keeping >=2 steps on the BH grid axis
    (megacore sharding on v7x) whenever bh_total >= 2."""
    lq8 = _round_up(lq, 8)
    q_cands = [q for q in (256, 128, 64, 32, 16, 8) if q <= lq8]
    if lq8 < 256:
        q_cands = sorted(set(q_cands + [lq8]), reverse=True)
    if not q_cands:
        q_cands = [lq8]
    bh_cands = sorted([d for d in range(1, min(bh_total, 8) + 1)
                       if bh_total % d == 0], reverse=True)
    for require_two in (True, False):
        for qb in q_cands:
            for bh in bh_cands:
                if require_two and bh_total >= 2 and bh_total // bh < 2:
                    continue
                if _footprint_bytes(bh, qb, lk, dk, dv, n_temp) <= budget:
                    return bh, qb
    return 1, min(q_cands[-1], 8) if q_cands else 8   # last resort


# ---------------------------------------------------------------------------
# Wrapper (mirrors sparse_dot_product)
# ---------------------------------------------------------------------------
def sparse_dot_product_attention(q, k, v, *, scale_factor, top_k):
    """q, k, v: [batch, n_heads, len, dim] float32.
    Returns (context f32, attn f32, mask_k bool) like the PyTorch module."""
    B, H, Lq, dk = q.shape
    Lk = k.shape[2]
    dv = v.shape[3]
    BH = B * H

    # torch: if top_k > key.size()[-1] (== dim): top_k = dim
    eff_top_k = min(int(top_k), dk)
    if not (1 <= eff_top_k <= Lk):
        # torch.topk(scores, top_k) would raise for this configuration.
        raise ValueError(f"top_k={eff_top_k} must be in [1, key_len={Lk}]")

    inv_scale = 1.0 / float(scale_factor)

    # f32 straight into the kernel (no standalone HBM bf16 cast pass); the
    # per-block scale + bf16 cast happens in VMEM inside the kernel.
    qf = q.reshape(BH, Lq, dk).astype(jnp.float32)
    kf = k.reshape(BH, Lk, dk).astype(jnp.float32)
    vf = v.reshape(BH, Lk, dv).astype(jnp.float32)

    n_temp = 8
    capacity = _vmem_capacity_bytes()
    budget = int(capacity * 0.8)               # headroom for Mosaic scratch
    bh_blk, q_blk = _choose_tiles(BH, Lq, Lk, dk, dv, budget, n_temp)

    # Pad Lq so q_blk tiles it exactly (padded rows are garbage, sliced off).
    Lq_pad = _round_up(Lq, q_blk)
    if Lq_pad != Lq:
        qf = jnp.pad(qf, ((0, 0), (0, Lq_pad - Lq), (0, 0)))

    # Grid: BH axis outermost, Lq axis innermost -> the K/V BlockSpec index
    # (i, 0, 0) is constant across consecutive j steps, so Pallas does NOT
    # re-DMA the full (bh_blk, Lk, d) K/V tiles for every query block.
    grid = (BH // bh_blk, Lq_pad // q_blk)

    kernel = functools.partial(_sparse_topk_attn_kernel,
                               top_k=eff_top_k, inv_scale=inv_scale)

    # Advisory cost estimate so XLA schedules surrounding ops sensibly.
    flops = 2 * BH * Lq_pad * Lk * (dk + dv)
    bytes_accessed = ((qf.size + kf.size + vf.size) * 4
                      + BH * Lq_pad * dv * 4 + BH * Lq_pad * Lk * 4
                      + BH * Lq_pad * Lk)
    cost = pl.CostEstimate(flops=flops, transcendentals=BH * Lq_pad * Lk,
                           bytes_accessed=bytes_accessed)

    fp = _footprint_bytes(bh_blk, q_blk, Lk, dk, dv, n_temp)
    vmem_limit = int(min(capacity, max(budget, fp)))

    ctx, attn, mask_i8 = pl.pallas_call(
        kernel,
        grid_spec=pltpu.PrefetchScalarGridSpec(
            num_scalar_prefetch=0,
            grid=grid,
            in_specs=[
                pl.BlockSpec((bh_blk, q_blk, dk), lambda i, j: (i, j, 0)),
                pl.BlockSpec((bh_blk, Lk, dk), lambda i, j: (i, 0, 0)),
                pl.BlockSpec((bh_blk, Lk, dv), lambda i, j: (i, 0, 0)),
            ],
            out_specs=[
                pl.BlockSpec((bh_blk, q_blk, dv), lambda i, j: (i, j, 0)),
                pl.BlockSpec((bh_blk, q_blk, Lk), lambda i, j: (i, j, 0)),
                pl.BlockSpec((bh_blk, q_blk, Lk), lambda i, j: (i, j, 0)),
            ],
        ),
        out_shape=(
            jax.ShapeDtypeStruct((BH, Lq_pad, dv), jnp.float32),
            jax.ShapeDtypeStruct((BH, Lq_pad, Lk), jnp.float32),
            jax.ShapeDtypeStruct((BH, Lq_pad, Lk), jnp.int8),
        ),
        compiler_params=pltpu.CompilerParams(
            dimension_semantics=("parallel", "parallel"),
            vmem_limit_bytes=vmem_limit),
        cost_estimate=cost,
    )(qf, kf, vf)

    ctx = ctx[:, :Lq, :].reshape(B, H, Lq, dv)
    attn = attn[:, :Lq, :].reshape(B, H, Lq, Lk)
    mask_k = mask_i8[:, :Lq, :].reshape(B, H, Lq, Lk).astype(jnp.bool_)
    return ctx, attn, mask_k


class ScaledDotProductAttention:
    """Mirror of the PyTorch module.  `dropout` is stored but never applied in
    the reference forward, so it is a no-op here as well."""

    def __init__(self, top_k, scale_factor, dropout=0.1):
        self.top_k = top_k
        self.scale_factor = scale_factor
        self.dropout = dropout  # unused by the reference forward

    def __call__(self, q, k, v):
        return sparse_dot_product_attention(
            q, k, v, scale_factor=self.scale_factor, top_k=self.top_k)


# ---------------------------------------------------------------------------
# Pure-JAX reference (mirrors the torch forward; uses the same bf16 MXU-operand
# rounding as the kernel so attn / ctx compare tightly).  Also returns the
# scores and threshold so the mask comparison can be tolerance-aware at ties.
# ---------------------------------------------------------------------------
def reference_sparse_dot_product(q, k, v, scale_factor, top_k):
    dk = q.shape[-1]
    tk = min(int(top_k), dk)
    inv_scale = 1.0 / float(scale_factor)
    qs = (q.astype(jnp.float32) * inv_scale).astype(jnp.bfloat16)
    ks = k.astype(jnp.bfloat16)
    scores = jnp.einsum("bhqd,bhkd->bhqk", qs, ks,
                        preferred_element_type=jnp.float32)
    vk = jax.lax.top_k(scores, tk)[0][..., -1:]
    mask_k = scores < vk
    attn = jax.nn.softmax(jnp.where(mask_k, jnp.float32(-1e18), scores), axis=-1)
    ctx = jnp.einsum("bhqk,bhkd->bhqd", attn.astype(jnp.bfloat16),
                     v.astype(jnp.bfloat16), preferred_element_type=jnp.float32)
    return ctx, attn, mask_k, scores, vk


# ---------------------------------------------------------------------------
# Main
# ---------------------------------------------------------------------------
if __name__ == "__main__":
    B, H, L, D = 2, 4, 8, 16                 # [batch, n_heads, seq, dim]
    top_k = 3
    scale_factor = float(np.sqrt(D))

    key = jax.random.PRNGKey(0)
    kq, kk, kv = jax.random.split(key, 3)
    q = jax.random.normal(kq, (B, H, L, D), jnp.float32)
    k = jax.random.normal(kk, (B, H, L, D), jnp.float32)
    v = jax.random.normal(kv, (B, H, L, D), jnp.float32)

    module = ScaledDotProductAttention(top_k=top_k, scale_factor=scale_factor)
    fwd = jax.jit(module.__call__)
    ctx, attn, mask_k = fwd(q, k, v)
    jax.block_until_ready((ctx, attn, mask_k))

    ref_ctx, ref_attn, ref_mask, ref_scores, ref_vk = (
        reference_sparse_dot_product(q, k, v, scale_factor, top_k))
    np.testing.assert_allclose(np.asarray(ctx), np.asarray(ref_ctx),
                               rtol=1e-2, atol=1e-2)
    np.testing.assert_allclose(np.asarray(attn), np.asarray(ref_attn),
                               rtol=1e-2, atol=1e-2)
    # Tolerance-aware mask check: any disagreement must sit at a tie-like
    # boundary |score - threshold| <= tol (accumulation-order ULP effects).
    mism = np.asarray(mask_k) != np.asarray(ref_mask)
    near_tie = np.abs(np.asarray(ref_scores) - np.asarray(ref_vk)) <= 1e-4
    assert np.all(~mism | near_tie), "mask_k mismatch away from top-k ties"

    print("KERNEL_OK")
</pallas_src>

<mosaic_0001>
module attributes {stable_mosaic.version = 11 : i64} {
  func.func @_sparse_topk_attn_kernel(%arg0: i32, %arg1: i32, %arg2: memref<4x8x16xf32, #tpu.memory_space<vmem>>, %arg3: memref<4x8x16xf32, #tpu.memory_space<vmem>>, %arg4: memref<4x8x16xf32, #tpu.memory_space<vmem>>, %arg5: memref<4x8x16xf32, #tpu.memory_space<vmem>>, %arg6: memref<4x8x8xf32, #tpu.memory_space<vmem>>, %arg7: memref<4x8x8xi8, #tpu.memory_space<vmem>>) attributes {dimension_semantics = [#tpu.dimension_semantics<parallel>, #tpu.dimension_semantics<parallel>], iteration_bounds = array<i64: 2, 1>, scalar_prefetch = 0 : i64, scratch_operands = 0 : i64, tpu.core_type = #tpu.core_type<tc>, window_params = [{transform_indices = @transform_0, window_bounds = array<i64: 4, 8, 16>}, {transform_indices = @transform_1, window_bounds = array<i64: 4, 8, 16>}, {transform_indices = @transform_2, window_bounds = array<i64: 4, 8, 16>}, {transform_indices = @transform_3, window_bounds = array<i64: 4, 8, 16>}, {transform_indices = @transform_4, window_bounds = array<i64: 4, 8, 8>}, {transform_indices = @transform_5, window_bounds = array<i64: 4, 8, 8>}]} {
    %c0 = arith.constant 0 : index
    %c0_0 = arith.constant 0 : index
    %c0_1 = arith.constant 0 : index
    %0 = vector.load %arg2[%c0, %c0_0, %c0_1] : memref<4x8x16xf32, #tpu.memory_space<vmem>>, vector<4x8x16xf32>
    %cst = arith.constant 2.500000e-01 : f32
    %1 = vector.broadcast %cst : f32 to vector<4x8x16xf32>
    %2 = arith.mulf %0, %1 : vector<4x8x16xf32>
    %3 = arith.truncf %2 : vector<4x8x16xf32> to vector<4x8x16xbf16>
    %c0_2 = arith.constant 0 : index
    %c0_3 = arith.constant 0 : index
    %c0_4 = arith.constant 0 : index
    %4 = vector.load %arg3[%c0_2, %c0_3, %c0_4] : memref<4x8x16xf32, #tpu.memory_space<vmem>>, vector<4x8x16xf32>
    %5 = arith.truncf %4 : vector<4x8x16xf32> to vector<4x8x16xbf16>
    "tpu.trace_start"() <{level = 10 : i32, message = "gqd,gkd->gqk"}> : () -> ()
    %cst_5 = arith.constant dense<0.000000e+00> : vector<4x8x8xf32>
    %6 = tpu.matmul %3, %5, %cst_5 {dimension_numbers = #tpu.dot_dimension_numbers<[2], [2], [1], [1], [0, 0, 0, 1, 1, 1], [0], [0]>} : vector<4x8x16xbf16>, vector<4x8x16xbf16>, vector<4x8x8xf32> -> vector<4x8x8xf32>
    "tpu.trace_stop"() : () -> ()
    %cst_6 = arith.constant dense<0xFF800000> : vector<4x8xf32>
    %7 = vector.multi_reduction <maximumf>, %6, %cst_6 [2] : vector<4x8x8xf32> to vector<4x8xf32>
    %8 = vector.shape_cast %7 : vector<4x8xf32> to vector<4x8x1xf32>
    %cst_7 = arith.constant 0xFF800000 : f32
    %9 = vector.broadcast %cst_7 : f32 to vector<4x8x1xf32>
    %cst_8 = arith.constant 3.000000e+00 : f32
    %10 = vector.broadcast %cst_8 : f32 to vector<4x8x1xf32>
    %11 = vector.broadcast %8 : vector<4x8x1xf32> to vector<4x8x8xf32>
    %12 = arith.cmpf oeq, %6, %11 : vector<4x8x8xf32>
    %cst_9 = arith.constant 1.000000e+00 : f32
    %cst_10 = arith.constant 0.000000e+00 : f32
    %13 = vector.broadcast %cst_9 : f32 to vector<4x8x8xf32>
    %14 = vector.broadcast %cst_10 : f32 to vector<4x8x8xf32>
    %15 = arith.select %12, %13, %14 : vector<4x8x8xi1>, vector<4x8x8xf32>
    %cst_11 = arith.constant dense<0.000000e+00> : vector<4x8xf32>
    %16 = vector.multi_reduction <add>, %15, %cst_11 [2] : vector<4x8x8xf32> to vector<4x8xf32>
    %17 = vector.shape_cast %16 : vector<4x8xf32> to vector<4x8x1xf32>
    %cst_12 = arith.constant 0.000000e+00 : f32
    %18 = vector.broadcast %cst_12 : f32 to vector<4x8x1xf32>
    %19 = arith.cmpf ogt, %10, %18 : vector<4x8x1xf32>
    %20 = arith.cmpf ole, %10, %17 : vector<4x8x1xf32>
    %21 = arith.andi %19, %20 : vector<4x8x1xi1>
    %22 = arith.select %21, %8, %9 : vector<4x8x1xi1>, vector<4x8x1xf32>
    %23 = arith.subf %10, %17 : vector<4x8x1xf32>
    %cst_13 = arith.constant 0xFF800000 : f32
    %24 = vector.broadcast %cst_13 : f32 to vector<4x8x8xf32>
    %25 = arith.select %12, %24, %6 : vector<4x8x8xi1>, vector<4x8x8xf32>
    %cst_14 = arith.constant dense<0xFF800000> : vector<4x8xf32>
    %26 = vector.multi_reduction <maximumf>, %25, %cst_14 [2] : vector<4x8x8xf32> to vector<4x8xf32>
    %27 = vector.shape_cast %26 : vector<4x8xf32> to vector<4x8x1xf32>
    %28 = vector.broadcast %27 : vector<4x8x1xf32> to vector<4x8x8xf32>
    %29 = arith.cmpf oeq, %25, %28 : vector<4x8x8xf32>
    %cst_15 = arith.constant 1.000000e+00 : f32
    %cst_16 = arith.constant 0.000000e+00 : f32
    %30 = vector.broadcast %cst_15 : f32 to vector<4x8x8xf32>
    %31 = vector.broadcast %cst_16 : f32 to vector<4x8x8xf32>
    %32 = arith.select %29, %30, %31 : vector<4x8x8xi1>, vector<4x8x8xf32>
    %cst_17 = arith.constant dense<0.000000e+00> : vector<4x8xf32>
    %33 = vector.multi_reduction <add>, %32, %cst_17 [2] : vector<4x8x8xf32> to vector<4x8xf32>
    %34 = vector.shape_cast %33 : vector<4x8xf32> to vector<4x8x1xf32>
    %cst_18 = arith.constant 0.000000e+00 : f32
    %35 = vector.broadcast %cst_18 : f32 to vector<4x8x1xf32>
    %36 = arith.cmpf ogt, %23, %35 : vector<4x8x1xf32>
    %37 = arith.cmpf ole, %23, %34 : vector<4x8x1xf32>
    %38 = arith.andi %36, %37 : vector<4x8x1xi1>
    %39 = arith.select %38, %27, %22 : vector<4x8x1xi1>, vector<4x8x1xf32>
    %40 = arith.subf %23, %34 : vector<4x8x1xf32>
    %cst_19 = arith.constant 0xFF800000 : f32
    %41 = vector.broadcast %cst_19 : f32 to vector<4x8x8xf32>
    %42 = arith.select %29, %41, %25 : vector<4x8x8xi1>, vector<4x8x8xf32>
    %cst_20 = arith.constant dense<0xFF800000> : vector<4x8xf32>
    %43 = vector.multi_reduction <maximumf>, %42, %cst_20 [2] : vector<4x8x8xf32> to vector<4x8xf32>
    %44 = vector.shape_cast %43 : vector<4x8xf32> to vector<4x8x1xf32>
    %45 = vector.broadcast %44 : vector<4x8x1xf32> to vector<4x8x8xf32>
    %46 = arith.cmpf oeq, %42, %45 : vector<4x8x8xf32>
    %cst_21 = arith.constant 1.000000e+00 : f32
    %cst_22 = arith.constant 0.000000e+00 : f32
    %47 = vector.broadcast %cst_21 : f32 to vector<4x8x8xf32>
    %48 = vector.broadcast %cst_22 : f32 to vector<4x8x8xf32>
    %49 = arith.select %46, %47, %48 : vector<4x8x8xi1>, vector<4x8x8xf32>
    %cst_23 = arith.constant dense<0.000000e+00> : vector<4x8xf32>
    %50 = vector.multi_reduction <add>, %49, %cst_23 [2] : vector<4x8x8xf32> to vector<4x8xf32>
    %51 = vector.shape_cast %50 : vector<4x8xf32> to vector<4x8x1xf32>
    %cst_24 = arith.constant 0.000000e+00 : f32
    %52 = vector.broadcast %cst_24 : f32 to vector<4x8x1xf32>
    %53 = arith.cmpf ogt, %40, %52 : vector<4x8x1xf32>
    %54 = arith.cmpf ole, %40, %51 : vector<4x8x1xf32>
    %55 = arith.andi %53, %54 : vector<4x8x1xi1>
    %56 = arith.select %55, %44, %39 : vector<4x8x1xi1>, vector<4x8x1xf32>
    %57 = vector.broadcast %56 : vector<4x8x1xf32> to vector<4x8x8xf32>
    %58 = arith.cmpf olt, %6, %57 : vector<4x8x8xf32>
    %cst_25 = arith.constant -9.99999984E+17 : f32
    %59 = vector.broadcast %cst_25 : f32 to vector<4x8x8xf32>
    %60 = arith.select %58, %59, %6 : vector<4x8x8xi1>, vector<4x8x8xf32>
    %61 = vector.broadcast %8 : vector<4x8x1xf32> to vector<4x8x8xf32>
    %62 = arith.subf %60, %61 : vector<4x8x8xf32>
    %63 = math.exp %62 : vector<4x8x8xf32>
    %cst_26 = arith.constant dense<0.000000e+00> : vector<4x8xf32>
    %64 = vector.multi_reduction <add>, %63, %cst_26 [2] : vector<4x8x8xf32> to vector<4x8xf32>
    %65 = vector.shape_cast %64 : vector<4x8xf32> to vector<4x8x1xf32>
    %66 = tpu.reciprocal %65 {approx = true} : vector<4x8x1xf32> -> vector<4x8x1xf32>
    %67 = vector.broadcast %66 : vector<4x8x1xf32> to vector<4x8x8xf32>
    %68 = arith.mulf %63, %67 : vector<4x8x8xf32>
    %69 = arith.truncf %68 : vector<4x8x8xf32> to vector<4x8x8xbf16>
    %c0_27 = arith.constant 0 : index
    %c0_28 = arith.constant 0 : index
    %c0_29 = arith.constant 0 : index
    %70 = vector.load %arg4[%c0_27, %c0_28, %c0_29] : memref<4x8x16xf32, #tpu.memory_space<vmem>>, vector<4x8x16xf32>
    %71 = arith.truncf %70 : vector<4x8x16xf32> to vector<4x8x16xbf16>
    "tpu.trace_start"() <{level = 10 : i32, message = "gqk,gkd->gqd"}> : () -> ()
    %cst_30 = arith.constant dense<0.000000e+00> : vector<4x8x16xf32>
    %72 = tpu.matmul %69, %71, %cst_30 {dimension_numbers = #tpu.dot_dimension_numbers<[2], [1], [1], [2], [0, 0, 0, 1, 1, 2], [0], [0]>} : vector<4x8x8xbf16>, vector<4x8x16xbf16>, vector<4x8x16xf32> -> vector<4x8x16xf32>
    "tpu.trace_stop"() : () -> ()
    %c0_31 = arith.constant 0 : index
    %c0_32 = arith.constant 0 : index
    %c0_33 = arith.constant 0 : index
    %73 = vector.load %arg5[%c0_31, %c0_32, %c0_33] : memref<4x8x16xf32, #tpu.memory_space<vmem>>, vector<4x8x16xf32>
    tpu.vector_store %arg5[%c0_31, %c0_32, %c0_33], %72 {strides = array<i32>} : memref<4x8x16xf32, #tpu.memory_space<vmem>>, vector<4x8x16xf32>,
    %c0_34 = arith.constant 0 : index
    %c0_35 = arith.constant 0 : index
    %c0_36 = arith.constant 0 : index
    %74 = vector.load %arg6[%c0_34, %c0_35, %c0_36] : memref<4x8x8xf32, #tpu.memory_space<vmem>>, vector<4x8x8xf32>
    tpu.vector_store %arg6[%c0_34, %c0_35, %c0_36], %68 {strides = array<i32>} : memref<4x8x8xf32, #tpu.memory_space<vmem>>, vector<4x8x8xf32>,
    %75 = arith.extui %58 : vector<4x8x8xi1> to vector<4x8x8xi8>
    %c0_37 = arith.constant 0 : index
    %c0_38 = arith.constant 0 : index
    %c0_39 = arith.constant 0 : index
    %76 = vector.load %arg7[%c0_37, %c0_38, %c0_39] : memref<4x8x8xi8, #tpu.memory_space<vmem>>, vector<4x8x8xi8>
    tpu.vector_store %arg7[%c0_37, %c0_38, %c0_39], %75 {strides = array<i32>} : memref<4x8x8xi8, #tpu.memory_space<vmem>>, vector<4x8x8xi8>,
    return
  }
  func.func @transform_0(%arg0: i32, %arg1: i32) -> (i32, i32, i32) {
    %c0_i32 = arith.constant 0 : i32
    %c0_i32_0 = arith.constant 0 : i32
    return %arg0, %arg1, %c0_i32 : i32, i32, i32
  }
  func.func @transform_1(%arg0: i32, %arg1: i32) -> (i32, i32, i32) {
    %c0_i32 = arith.constant 0 : i32
    %c0_i32_0 = arith.constant 0 : i32
    %c0_i32_1 = arith.constant 0 : i32
    return %arg0, %c0_i32, %c0_i32_0 : i32, i32, i32
  }
  func.func @transform_2(%arg0: i32, %arg1: i32) -> (i32, i32, i32) {
    %c0_i32 = arith.constant 0 : i32
    %c0_i32_0 = arith.constant 0 : i32
    %c0_i32_1 = arith.constant 0 : i32
    return %arg0, %c0_i32, %c0_i32_0 : i32, i32, i32
  }
  func.func @transform_3(%arg0: i32, %arg1: i32) -> (i32, i32, i32) {
    %c0_i32 = arith.constant 0 : i32
    %c0_i32_0 = arith.constant 0 : i32
    return %arg0, %arg1, %c0_i32 : i32, i32, i32
  }
  func.func @transform_4(%arg0: i32, %arg1: i32) -> (i32, i32, i32) {
    %c0_i32 = arith.constant 0 : i32
    %c0_i32_0 = arith.constant 0 : i32
    return %arg0, %arg1, %c0_i32 : i32, i32, i32
  }
  func.func @transform_5(%arg0: i32, %arg1: i32) -> (i32, i32, i32) {
    %c0_i32 = arith.constant 0 : i32
    %c0_i32_0 = arith.constant 0 : i32
    return %arg0, %arg1, %c0_i32 : i32, i32, i32
  }
}

</mosaic_0001>

<llo_original>
// kernel: a_call__.1
$region0: #{a_call__.1}
  #allocation0 [shape = 'u32[]', space=smem, size = 0x4, offset = 0x4, fixed_abs, tag = 'smem constant byte address 0x4 - core index']
  #allocation1 [shape = 'u32[144,128]{1,0:T(1,128)}', space=vmem, size = 0x12000, scoped, tag = 'internal scratch']
  %s0 = inlined_call_operand.hbm [shape: f32[8,8,16], index: 0, kind: input, shape index: {}]
  %s1 = inlined_call_operand.hbm [shape: f32[8,8,16], index: 1, kind: input, shape index: {}]
  %s2 = inlined_call_operand.hbm [shape: f32[8,8,16], index: 2, kind: input, shape index: {}]
  %s3 = inlined_call_operand.hbm [shape: f32[8,8,16], index: 3, kind: output, shape index: {0}]
  %s4 = inlined_call_operand.hbm [shape: f32[8,8,8], index: 4, kind: output, shape index: {1}]
  %s5 = inlined_call_operand.vmem [shape: s8[8,8,8], index: 5, kind: output, shape index: {2}]
  %6 = xla_tuple %s3, %s4, %s5
  %s7 = sld [smem:[#allocation0]]
  $region73: #{a_call__.1} parent=0
    _
  %s9 = ssub.s32 1, %s7
  %s10 = scalar_select 0, %s9, %s7
  $region1: #{a_call__.1} parent=0
    #allocation2 [shape = 'u8[32768]{0}', space=vmem, size = 0x8000, scoped, tag = 'input window, operand 0']
    #allocation3 [shape = 's32[2]{0}', space=sflag, size = 0x8, scoped, tag = 'scoped memory for a_call__.1']
    #allocation4 [shape = 's32[2]{0}', space=sflag, size = 0x8, scoped, tag = 'scoped memory for a_call__.1']
    #allocation5 [shape = 'u8[32768]{0}', space=vmem, size = 0x8000, scoped, tag = 'input window, operand 1']
    #allocation6 [shape = 's32[2]{0}', space=sflag, size = 0x8, scoped, tag = 'scoped memory for a_call__.1']
    #allocation7 [shape = 'u8[32768]{0}', space=vmem, size = 0x8000, scoped, tag = 'input window, operand 2']
    #allocation8 [shape = 'u8[32768]{0}', space=vmem, size = 0x8000, scoped, tag = 'output window, operand 0']
    #allocation9 [shape = 'u8[32768]{0}', space=vmem, size = 0x8000, scoped, tag = 'output window, operand 1']
    #allocation10 [shape = 's32[2]{0}', space=sflag, size = 0x8, scoped, tag = 'scoped memory for a_call__.1']
    %11 = vsyncpa [#allocation3], 0
    %s12 = scalar_lea.sflag [#allocation3], 1
    %13 = vsyncpa %s12, 0
    %14 = vsyncpa [#allocation6], 0
    %s15 = scalar_lea.sflag [#allocation6], 1
    %16 = vsyncpa %s15, 0
    %17 = vsyncpa [#allocation4], 0
    %s18 = scalar_lea.sflag [#allocation4], 1
    %19 = vsyncpa %s18, 0
    %20 = vsyncpa [#allocation10], 0
    %s21 = scalar_lea.sflag [#allocation10], 1
    %22 = vsyncpa %s21, 0
    loop: start=0, step=1, limit=4
    $region2: #{a_call__.1} parent=1 // loop_pre_header
      _
    $region3: #{a_call__.1} parent=1 // loop_header
      %s24 = sphi 0, %s28
      %p25 = scmp.ge.s32.totalorder %s24, 4
      %s31 = sphi 0, %s43
      %s32 = sphi 0, %s39
      %s33 = sphi 0, %s31
      %s34 = sphi 0, %s32
      %s35 = sphi 0, %s33
      %s36 = sphi 0, %s34
      %s48 = sphi 0, %s50
      %s51 = sphi 0, %s48
      %s52 = sphi 0, %s51
      %s68 = sphi 0, %s52
      %s74 = sphi 0, %s76
      %s77 = sphi 0, %s74
      %s78 = sphi 0, %s77
      %s94 = sphi 0, %s78
      %s100 = sphi 0, %s102
      %s103 = sphi 0, %s100
      %s104 = sphi 0, %s103
      %s120 = sphi 0, %s104
      %s128 = sphi 0, %s130
      %s131 = sphi 0, %s128
      %s132 = sphi 0, %s131
      %s148 = sphi 0, %s132
      %s156 = sphi 0, %s158
      %s159 = sphi 0, %s156
      %s160 = sphi 0, %s159
      %s176 = sphi 0, %s160
      %s184 = sphi 0, %s186
      %s187 = sphi 0, %s184
      %s188 = sphi 0, %s187
      %s204 = sphi 0, %s188
    $region4: #{a_call__.1} parent=1 // loop_header_branch
      %27 = sbr.rel (%p25) target = $region8
    $region5: #{a_call__.1} parent=1 // loop_body
      %s29 = ssub.s32 %s24, 1
      %s30 = ssub.s32 %s24, 2
      %s37 = sadd.s32 1, %s32
      %p38 = scmp.ge.s32.totalorder %s37, 1
      %s39 = scalar_select %p38, 0, %s37
      %s40 = sadd.s32 1, %s31
      %s41 = scalar_select %p38, %s40, %s31
      %p42 = scmp.ge.s32.totalorder %s41, 2
      %s43 = scalar_select %p42, 0, %s41
      %s44 = ssub.s32 %s31, %s43
      %s45 = ssub.s32 %s32, %s39
      %s46 = sor.u32 %s44, %s45
      %p47 = scmp.eq.s32.totalorder %s46, 0
      %s49 = sadd.s32 %s48, 1
      %s50 = scalar_select %p47, %s48, %s49
      %p53 = pneg %p47
      %p54 = scmp.eq.s32.totalorder %s24, 1
      %p55 = por %p53, %p54
      %p56 = scmp.ne.s32.totalorder %s48, %s51
      %p57 = scmp.eq.s32.totalorder %s24, 0
      %p58 = por %p56, %p57
      %p59 = scmp.ne.s32.totalorder %s48, %s51
      %p60 = scmp.eq.s32.totalorder %s29, 1
      %p61 = por %p59, %p60
      %p62 = scmp.ne.s32.totalorder %s51, %s52
      %p63 = scmp.eq.s32.totalorder %s29, 0
      %p64 = por %p62, %p63
      %p65 = scmp.ne.s32.totalorder %s51, %s52
      %p66 = scmp.eq.s32.totalorder %s30, 1
      %p67 = por %p65, %p66
      %p69 = scmp.ne.s32.totalorder %s52, %s68
      %p70 = scmp.eq.s32.totalorder %s30, 0
      %p71 = por %p69, %p70
      %s72 = ssub.s32 %s31, %s43
      %p73 = scmp.eq.s32.totalorder %s72, 0
      %s75 = sadd.s32 %s74, 1
      %s76 = scalar_select %p73, %s74, %s75
      %p79 = pneg %p73
      %p80 = scmp.eq.s32.totalorder %s24, 1
      %p81 = por %p79, %p80
      %p82 = scmp.ne.s32.totalorder %s74, %s77
      %p83 = scmp.eq.s32.totalorder %s24, 0
      %p84 = por %p82, %p83
      %p85 = scmp.ne.s32.totalorder %s74, %s77
      %p86 = scmp.eq.s32.totalorder %s29, 1
      %p87 = por %p85, %p86
      %p88 = scmp.ne.s32.totalorder %s77, %s78
      %p89 = scmp.eq.s32.totalorder %s29, 0
      %p90 = por %p88, %p89
      %p91 = scmp.ne.s32.totalorder %s77, %s78
      %p92 = scmp.eq.s32.totalorder %s30, 1
      %p93 = por %p91, %p92
      %p95 = scmp.ne.s32.totalorder %s78, %s94
      %p96 = scmp.eq.s32.totalorder %s30, 0
      %p97 = por %p95, %p96
      %s98 = ssub.s32 %s31, %s43
      %p99 = scmp.eq.s32.totalorder %s98, 0
      %s101 = sadd.s32 %s100, 1
      %s102 = scalar_select %p99, %s100, %s101
      %p105 = pneg %p99
      %p106 = scmp.eq.s32.totalorder %s24, 1
      %p107 = por %p105, %p106
      %p108 = scmp.ne.s32.totalorder %s100, %s103
      %p109 = scmp.eq.s32.totalorder %s24, 0
      %p110 = por %p108, %p109
      %p111 = scmp.ne.s32.totalorder %s100, %s103
      %p112 = scmp.eq.s32.totalorder %s29, 1
      %p113 = por %p111, %p112
      %p114 = scmp.ne.s32.totalorder %s103, %s104
      %p115 = scmp.eq.s32.totalorder %s29, 0
      %p116 = por %p114, %p115
      %p117 = scmp.ne.s32.totalorder %s103, %s104
      %p118 = scmp.eq.s32.totalorder %s30, 1
      %p119 = por %p117, %p118
      %p121 = scmp.ne.s32.totalorder %s104, %s120
      %p122 = scmp.eq.s32.totalorder %s30, 0
      %p123 = por %p121, %p122
      %s124 = ssub.s32 %s31, %s43
      %s125 = ssub.s32 %s32, %s39
      %s126 = sor.u32 %s124, %s125
      %p127 = scmp.eq.s32.totalorder %s126, 0
      %s129 = sadd.s32 %s128, 1
      %s130 = scalar_select %p127, %s128, %s129
      %p133 = pneg %p127
      %p134 = scmp.eq.s32.totalorder %s24, 1
      %p135 = por %p133, %p134
      %p136 = scmp.ne.s32.totalorder %s128, %s131
      %p137 = scmp.eq.s32.totalorder %s24, 0
      %p138 = por %p136, %p137
      %p139 = scmp.ne.s32.totalorder %s128, %s131
      %p140 = scmp.eq.s32.totalorder %s29, 1
      %p141 = por %p139, %p140
      %p142 = scmp.ne.s32.totalorder %s131, %s132
      %p143 = scmp.eq.s32.totalorder %s29, 0
      %p144 = por %p142, %p143
      %p145 = scmp.ne.s32.totalorder %s131, %s132
      %p146 = scmp.eq.s32.totalorder %s30, 1
      %p147 = por %p145, %p146
      %p149 = scmp.ne.s32.totalorder %s132, %s148
      %p150 = scmp.eq.s32.totalorder %s30, 0
      %p151 = por %p149, %p150
      %s152 = ssub.s32 %s31, %s43
      %s153 = ssub.s32 %s32, %s39
      %s154 = sor.u32 %s152, %s153
      %p155 = scmp.eq.s32.totalorder %s154, 0
      %s157 = sadd.s32 %s156, 1
      %s158 = scalar_select %p155, %s156, %s157
      %p161 = pneg %p155
      %p162 = scmp.eq.s32.totalorder %s24, 1
      %p163 = por %p161, %p162
      %p164 = scmp.ne.s32.totalorder %s156, %s159
      %p165 = scmp.eq.s32.totalorder %s24, 0
      %p166 = por %p164, %p165
      %p167 = scmp.ne.s32.totalorder %s156, %s159
      %p168 = scmp.eq.s32.totalorder %s29, 1
      %p169 = por %p167, %p168
      %p170 = scmp.ne.s32.totalorder %s159, %s160
      %p171 = scmp.eq.s32.totalorder %s29, 0
      %p172 = por %p170, %p171
      %p173 = scmp.ne.s32.totalorder %s159, %s160
      %p174 = scmp.eq.s32.totalorder %s30, 1
      %p175 = por %p173, %p174
      %p177 = scmp.ne.s32.totalorder %s160, %s176
      %p178 = scmp.eq.s32.totalorder %s30, 0
      %p179 = por %p177, %p178
      %s180 = ssub.s32 %s31, %s43
      %s181 = ssub.s32 %s32, %s39
      %s182 = sor.u32 %s180, %s181
      %p183 = scmp.eq.s32.totalorder %s182, 0
      %s185 = sadd.s32 %s184, 1
      %s186 = scalar_select %p183, %s184, %s185
      %p189 = pneg %p183
      %p190 = scmp.eq.s32.totalorder %s24, 1
      %p191 = por %p189, %p190
      %p192 = scmp.ne.s32.totalorder %s184, %s187
      %p193 = scmp.eq.s32.totalorder %s24, 0
      %p194 = por %p192, %p193
      %p195 = scmp.ne.s32.totalorder %s184, %s187
      %p196 = scmp.eq.s32.totalorder %s29, 1
      %p197 = por %p195, %p196
      %p198 = scmp.ne.s32.totalorder %s187, %s188
      %p199 = scmp.eq.s32.totalorder %s29, 0
      %p200 = por %p198, %p199
      %p201 = scmp.ne.s32.totalorder %s187, %s188
      %p202 = scmp.eq.s32.totalorder %s30, 1
      %p203 = por %p201, %p202
      %p205 = scmp.ne.s32.totalorder %s188, %s204
      %p206 = scmp.eq.s32.totalorder %s30, 0
      %p207 = por %p205, %p206
      %p208 = scmp.le.s32.totalorder 1, %s24
      %p209 = scmp.lt.s32.totalorder %s24, 3
      %p210 = pnand %p208, %p209
      %p211 = pneg %p210
      // Predicated region
      $region9: #{a_call__.1} parent=5 // pred_check
        _
      $region10: #{a_call__.1} parent=5 // pred_check_branch
        %213 = sbr.rel (%p210) target = $region12
      $region11: #{a_call__.1} parent=5 // pred_region
        %s214 = ssub.s32 %s24, 1
      $region12: #{a_call__.1} parent=5 // pred_fallthru
        _
      %p215 = scmp.lt.s32.totalorder %s24, 2
      // Predicated region
      $region13: #{a_call__.1} parent=5 // pred_check
        %p216 = pneg %p215
      $region14: #{a_call__.1} parent=5 // pred_check_branch
        %218 = sbr.rel (%p216) target = $region16
      $region15: #{a_call__.1} parent=5 // pred_region
        // Predicated region
        $region17: #{a_call__.1} parent=15 // pred_check
          %p219 = pneg %p58
        $region18: #{a_call__.1} parent=15 // pred_check_branch
          %221 = sbr.rel (%p219) target = $region20
        $region19: #{a_call__.1} parent=15 // pred_region
          %s222 = sand.u32 %s48, 1
          %s223 = scalar_lea.sflag [#allocation3], %s222
          %s224 = sand.u32 %s48, 1
          %s225 = smul.addr %s224, 32
          %s226 = scalar_lea.vmem [#allocation2], %s225
          %s227 = smul.u32 4, %s31
          %s229 = ssub.s32 512, 512
          %230 = vsyncadd %s223, %s229
          %s231 = sadd.s32 %s32, %s227
          %s232 = smul.addr %s231, 128
          %s233 = scalar_lea.hbm %s0, %s232
          %s234 = sshll.u32 %s226, 4
          %s235 = int_to_ptr.vmem [resolvable:$true] %s234
          %240 = dma.hbm_to_vmem [thread:$0]  %s233, 512, %s235, %s223, 128, 128, 8
        $region20: #{a_call__.1} parent=15 // pred_fallthru
          _
        // Predicated region
        $region21: #{a_call__.1} parent=15 // pred_check
          %p241 = pneg %p84
        $region22: #{a_call__.1} parent=15 // pred_check_branch
          %243 = sbr.rel (%p241) target = $region24
        $region23: #{a_call__.1} parent=15 // pred_region
          %s244 = sand.u32 %s24, 1
          %s245 = scalar_lea.sflag [#allocation6], %s244
          %s246 = sand.u32 %s74, 1
          %s247 = smul.addr %s246, 32
          %s248 = scalar_lea.vmem [#allocation5], %s247
          %s249 = smul.u32 4, %s31
          %s251 = ssub.s32 512, 512
          %252 = vsyncadd %s245, %s251
          %s253 = smul.addr %s249, 128
          %s254 = scalar_lea.hbm %s1, %s253
          %s255 = sshll.u32 %s248, 4
          %s256 = int_to_ptr.vmem [resolvable:$true] %s255
          %261 = dma.hbm_to_vmem [thread:$0]  %s254, 512, %s256, %s245, 128, 128, 8
        $region24: #{a_call__.1} parent=15 // pred_fallthru
          _
        // Predicated region
        $region25: #{a_call__.1} parent=15 // pred_check
          %p262 = pneg %p110
        $region26: #{a_call__.1} parent=15 // pred_check_branch
          %264 = sbr.rel (%p262) target = $region28
        $region27: #{a_call__.1} parent=15 // pred_region
          %s265 = sand.u32 %s24, 1
          %s266 = scalar_lea.sflag [#allocation6], %s265
          %s267 = sand.u32 %s100, 1
          %s268 = smul.addr %s267, 32
          %s269 = scalar_lea.vmem [#allocation7], %s268
          %s270 = smul.u32 4, %s31
          %s272 = ssub.s32 512, 512
          %273 = vsyncadd %s266, %s272
          %s274 = smul.addr %s270, 128
          %s275 = scalar_lea.hbm %s2, %s274
          %s276 = sshll.u32 %s269, 4
          %s277 = int_to_ptr.vmem [resolvable:$true] %s276
          %282 = dma.hbm_to_vmem [thread:$0]  %s275, 512, %s277, %s266, 128, 128, 8
        $region28: #{a_call__.1} parent=15 // pred_fallthru
          _
      $region16: #{a_call__.1} parent=5 // pred_fallthru
        _
      %p283 = scmp.le.s32.totalorder 1, %s24
      %p284 = scmp.lt.s32.totalorder %s24, 3
      %p285 = pnand %p283, %p284
      %p286 = pneg %p285
      // Predicated region
      $region29: #{a_call__.1} parent=5 // pred_check
        _
      $region30: #{a_call__.1} parent=5 // pred_check_branch
        %288 = sbr.rel (%p285) target = $region32
      $region31: #{a_call__.1} parent=5 // pred_region
        %s289 = ssub.s32 %s24, 1
        %s290 = sand.u32 %s51, 1
        %s291 = scalar_lea.sflag [#allocation3], %s290
        %s292 = sand.u32 %s51, 1
        %s293 = smul.addr %s292, 32
        %s294 = scalar_lea.vmem [#allocation2], %s293
        // Predicated region
        $region33: #{a_call__.1} parent=31 // pred_check
          %p295 = pneg %p64
        $region34: #{a_call__.1} parent=31 // pred_check_branch
          %297 = sbr.rel (%p295) target = $region36
        $region35: #{a_call__.1} parent=31 // pred_region
          %298 = dma.done %s291, 512
        $region36: #{a_call__.1} parent=31 // pred_fallthru
          _
        %s299 = sand.u32 %s29, 1
        %s300 = scalar_lea.sflag [#allocation6], %s299
        %s301 = sand.u32 %s77, 1
        %s302 = smul.addr %s301, 32
        %s303 = scalar_lea.vmem [#allocation5], %s302
        // Predicated region
        $region37: #{a_call__.1} parent=31 // pred_check
          %p304 = pneg %p90
        $region38: #{a_call__.1} parent=31 // pred_check_branch
          %306 = sbr.rel (%p304) target = $region40
        $region39: #{a_call__.1} parent=31 // pred_region
          %307 = dma.done %s300, 512
        $region40: #{a_call__.1} parent=31 // pred_fallthru
          _
        %s308 = sand.u32 %s29, 1
        %s309 = scalar_lea.sflag [#allocation6], %s308
        %s310 = sand.u32 %s103, 1
        %s311 = smul.addr %s310, 32
        %s312 = scalar_lea.vmem [#allocation7], %s311
        // Predicated region
        $region41: #{a_call__.1} parent=31 // pred_check
          %p313 = pneg %p116
        $region42: #{a_call__.1} parent=31 // pred_check_branch
          %315 = sbr.rel (%p313) target = $region44
        $region43: #{a_call__.1} parent=31 // pred_region
          %316 = dma.done %s309, 512
        $region44: #{a_call__.1} parent=31 // pred_fallthru
          _
        %s317 = sand.u32 %s51, 1
        %s318 = scalar_lea.sflag [#allocation3], %s317
        %s319 = sand.u32 %s51, 1
        %s320 = smul.addr %s319, 32
        %s321 = scalar_lea.vmem [#allocation2], %s320
        %p322 = pneg %p64
        %p323 = pneg %p61
        %s324 = sand.u32 %s29, 1
        %s325 = scalar_lea.sflag [#allocation6], %s324
        %s326 = sand.u32 %s77, 1
        %s327 = smul.addr %s326, 32
        %s328 = scalar_lea.vmem [#allocation5], %s327
        %p329 = pneg %p90
        %p330 = pneg %p87
        %s331 = sand.u32 %s29, 1
        %s332 = scalar_lea.sflag [#allocation6], %s331
        %s333 = sand.u32 %s103, 1
        %s334 = smul.addr %s333, 32
        %s335 = scalar_lea.vmem [#allocation7], %s334
        %p336 = pneg %p116
        %p337 = pneg %p113
        %p338 = pneg %p144
        %p339 = pneg %p141
        %s340 = sand.u32 %s131, 1
        %s341 = scalar_lea.sflag [#allocation4], %s340
        %s342 = sand.u32 %s131, 1
        %s343 = smul.addr %s342, 32
        %s344 = scalar_lea.vmem [#allocation8], %s343
        %p345 = pneg %p172
        %p346 = pneg %p169
        %s347 = sand.u32 %s159, 1
        %s348 = scalar_lea.sflag [#allocation10], %s347
        %s349 = sand.u32 %s159, 1
        %s350 = smul.addr %s349, 32
        %s351 = scalar_lea.vmem [#allocation9], %s350
        %p352 = pneg %p200
        %p353 = pneg %p197
        %s354 = smul.u32 4, %s33
        %p355 = scmp.lt.s32.totalorder %s354, 7
        %s356 = scalar_select %p355, %s354, 7
        %p357 = scmp.lt.s32.totalorder %s34, 0
        %s358 = scalar_select %p357, %s34, 0
        %s359 = sadd.s32 %s358, %s356
        %s360 = smul.addr %s359, 2
        %s361 = scalar_lea.vmem %s5, %s360
        %s362 = smul.u32 4, %s33
        %s363 = smul.u32 4, %s33
        %s364 = smul.u32 4, %s33
        %s365 = smul.u32 4, %s33
        %s366 = smul.u32 4, %s33
        %s367 = smul.u32 4, %s33
        %p368 = scmp.lt.s32.totalorder %s367, 7
        %s369 = scalar_select %p368, %s367, 7
        %p370 = scmp.lt.s32.totalorder %s34, 0
        %s371 = scalar_select %p370, %s34, 0
        %s372 = sadd.s32 %s371, %s369
        %s373 = smul.addr %s372, 2
        %s374 = scalar_lea.vmem %s5, %s373
        %s375 = smul.u32 4, %s33
        %v379 = vld [vmem:[%s294] sm:$0xff]
        %v380 = vld [vmem:[%s294 + $0x8] sm:$0xff]
        %v381 = vld [vmem:[%s294 + $0x10] sm:$0xff]
        %v382 = vld [vmem:[%s294 + $0x18] sm:$0xff]
        %v383 = vmul.f32 %v379, 0.25
        %v384 = vmul.f32 %v380, 0.25
        %v385 = vmul.f32 %v381, 0.25
        %v386 = vmul.f32 %v382, 0.25
        %v387 = vpack.c.bf16 %v383, %v383
        %v388 = vpack.c.bf16 %v384, %v384
        %v389 = vpack.c.bf16 %v385, %v385
        %v390 = vpack.c.bf16 %v386, %v386
        %v391 = vld [vmem:[%s303] sm:$0xff]
        %v392 = vld [vmem:[%s303 + $0x8] sm:$0xff]
        %v393 = vld [vmem:[%s303 + $0x10] sm:$0xff]
        %v394 = vld [vmem:[%s303 + $0x18] sm:$0xff]
        %v395 = vpack.c.bf16 %v391, %v391
        %v396 = vpack.c.bf16 %v392, %v392
        %v397 = vpack.c.bf16 %v393, %v393
        %v398 = vpack.c.bf16 %v394, %v394
        %vm399 = vcmask 130048
        %v401 = vsel %vm399, %v387, 0
        %v404 = vsel %vm399, %v395, 0
        %406 = vmatprep.subr.bf16.mxu0 0
        %407 = vmatpush1.bf16.xpose.msra.mxu0 %v404
        %408 = vmatprep.subr.bf16.mxu0 0
        %409 = vmatpush1.bf16.xpose.msra.mxu0 0
        %410 = vmatprep.subr.bf16.mxu0 0
        %411 = vmatpush1.bf16.xpose.msra.mxu0 0
        %412 = vmatprep.subr.bf16.mxu0 0
        %413 = vmatpush1.bf16.xpose.msra.mxu0 0
        %414 = vmatprep.subr.bf16.mxu0 0
        %415 = vmatpush1.bf16.xpose.msra.mxu0 0
        %416 = vmatprep.subr.bf16.mxu0 0
        %417 = vmatpush1.bf16.xpose.msra.mxu0 0
        %418 = vmatprep.subr.bf16.mxu0 0
        %419 = vmatpush1.bf16.xpose.msra.mxu0 0
        %420 = vmatprep.subr.bf16.mxu0 0
        %421 = vmatpush1.bf16.xpose.msra.mxu0 0
        %422 = vmatprep.subr.bf16.mxu0 0
        %423 = vmatpush1.bf16.xpose.msra.mxu0 0
        %424 = vmatprep.subr.bf16.mxu0 0
        %425 = vmatpush1.bf16.xpose.msra.mxu0 0
        %426 = vmatprep.subr.bf16.mxu0 0
        %427 = vmatpush1.bf16.xpose.msra.mxu0 0
        %428 = vmatprep.subr.bf16.mxu0 0
        %429 = vmatpush1.bf16.xpose.msra.mxu0 0
        %430 = vmatprep.subr.bf16.mxu0 0
        %431 = vmatpush1.bf16.xpose.msra.mxu0 0
        %432 = vmatprep.subr.bf16.mxu0 0
        %433 = vmatpush1.bf16.xpose.msra.mxu0 0
        %434 = vmatprep.subr.bf16.mxu0 0
        %435 = vmatpush1.bf16.xpose.msra.mxu0 0
        %436 = vmatprep.subr.bf16.mxu0 0
        %437 = vmatpush1.bf16.xpose.msra.mxu0 0
        %438 = vmatprep.mubr.bf16.mxu0 0
        %439 = vmatmul.mubr.bf16.gmra.mrb[0].mxu0 %v401
        %v440 = vpop.f32.mrb[0].mxu0
        %v441 = vadd.f32 0.0, %v440
        %v442 = vpop.f32.mrb[0].mxu0
        %v443 = vpop.f32.mrb[0].mxu0
        %v444 = vpop.f32.mrb[0].mxu0
        %445 = vdwg.mxu0
        %v447 = vsel %vm399, %v388, 0
        %v450 = vsel %vm399, %v396, 0
        %452 = vmatprep.subr.bf16.mxu0 0
        %453 = vmatpush1.bf16.xpose.msra.mxu0 %v450
        %454 = vmatprep.subr.bf16.mxu0 0
        %455 = vmatpush1.bf16.xpose.msra.mxu0 0
        %456 = vmatprep.subr.bf16.mxu0 0
        %457 = vmatpush1.bf16.xpose.msra.mxu0 0
        %458 = vmatprep.subr.bf16.mxu0 0
        %459 = vmatpush1.bf16.xpose.msra.mxu0 0
        %460 = vmatprep.subr.bf16.mxu0 0
        %461 = vmatpush1.bf16.xpose.msra.mxu0 0
        %462 = vmatprep.subr.bf16.mxu0 0
        %463 = vmatpush1.bf16.xpose.msra.mxu0 0
        %464 = vmatprep.subr.bf16.mxu0 0
        %465 = vmatpush1.bf16.xpose.msra.mxu0 0
        %466 = vmatprep.subr.bf16.mxu0 0
        %467 = vmatpush1.bf16.xpose.msra.mxu0 0
        %468 = vmatprep.subr.bf16.mxu0 0
        %469 = vmatpush1.bf16.xpose.msra.mxu0 0
        %470 = vmatprep.subr.bf16.mxu0 0
        %471 = vmatpush1.bf16.xpose.msra.mxu0 0
        %472 = vmatprep.subr.bf16.mxu0 0
        %473 = vmatpush1.bf16.xpose.msra.mxu0 0
        %474 = vmatprep.subr.bf16.mxu0 0
        %475 = vmatpush1.bf16.xpose.msra.mxu0 0
        %476 = vmatprep.subr.bf16.mxu0 0
        %477 = vmatpush1.bf16.xpose.msra.mxu0 0
        %478 = vmatprep.subr.bf16.mxu0 0
        %479 = vmatpush1.bf16.xpose.msra.mxu0 0
        %480 = vmatprep.subr.bf16.mxu0 0
        %481 = vmatpush1.bf16.xpose.msra.mxu0 0
        %482 = vmatprep.subr.bf16.mxu0 0
        %483 = vmatpush1.bf16.xpose.msra.mxu0 0
        %484 = vmatprep.mubr.bf16.mxu0 0
        %485 = vmatmul.mubr.bf16.gmra.mrb[0].mxu0 %v447
        %v486 = vpop.f32.mrb[0].mxu0
        %v487 = vadd.f32 0.0, %v486
        %v488 = vpop.f32.mrb[0].mxu0
        %v489 = vpop.f32.mrb[0].mxu0
        %v490 = vpop.f32.mrb[0].mxu0
        %491 = vdwg.mxu0
        %v493 = vsel %vm399, %v389, 0
        %v496 = vsel %vm399, %v397, 0
        %498 = vmatprep.subr.bf16.mxu0 0
        %499 = vmatpush1.bf16.xpose.msra.mxu0 %v496
        %500 = vmatprep.subr.bf16.mxu0 0
        %501 = vmatpush1.bf16.xpose.msra.mxu0 0
        %502 = vmatprep.subr.bf16.mxu0 0
        %503 = vmatpush1.bf16.xpose.msra.mxu0 0
        %504 = vmatprep.subr.bf16.mxu0 0
        %505 = vmatpush1.bf16.xpose.msra.mxu0 0
        %506 = vmatprep.subr.bf16.mxu0 0
        %507 = vmatpush1.bf16.xpose.msra.mxu0 0
        %508 = vmatprep.subr.bf16.mxu0 0
        %509 = vmatpush1.bf16.xpose.msra.mxu0 0
        %510 = vmatprep.subr.bf16.mxu0 0
        %511 = vmatpush1.bf16.xpose.msra.mxu0 0
        %512 = vmatprep.subr.bf16.mxu0 0
        %513 = vmatpush1.bf16.xpose.msra.mxu0 0
        %514 = vmatprep.subr.bf16.mxu0 0
        %515 = vmatpush1.bf16.xpose.msra.mxu0 0
        %516 = vmatprep.subr.bf16.mxu0 0
        %517 = vmatpush1.bf16.xpose.msra.mxu0 0
        %518 = vmatprep.subr.bf16.mxu0 0
        %519 = vmatpush1.bf16.xpose.msra.mxu0 0
        %520 = vmatprep.subr.bf16.mxu0 0
        %521 = vmatpush1.bf16.xpose.msra.mxu0 0
        %522 = vmatprep.subr.bf16.mxu0 0
        %523 = vmatpush1.bf16.xpose.msra.mxu0 0
        %524 = vmatprep.subr.bf16.mxu0 0
        %525 = vmatpush1.bf16.xpose.msra.mxu0 0
        %526 = vmatprep.subr.bf16.mxu0 0
        %527 = vmatpush1.bf16.xpose.msra.mxu0 0
        %528 = vmatprep.subr.bf16.mxu0 0
        %529 = vmatpush1.bf16.xpose.msra.mxu0 0
        %530 = vmatprep.mubr.bf16.mxu0 0
        %531 = vmatmul.mubr.bf16.gmra.mrb[0].mxu0 %v493
        %v532 = vpop.f32.mrb[0].mxu0
        %v533 = vadd.f32 0.0, %v532
        %v534 = vpop.f32.mrb[0].mxu0
        %v535 = vpop.f32.mrb[0].mxu0
        %v536 = vpop.f32.mrb[0].mxu0
        %537 = vdwg.mxu0
        %v539 = vsel %vm399, %v390, 0
        %v542 = vsel %vm399, %v398, 0
        %544 = vmatprep.subr.bf16.mxu0 0
        %545 = vmatpush1.bf16.xpose.msra.mxu0 %v542
        %546 = vmatprep.subr.bf16.mxu0 0
        %547 = vmatpush1.bf16.xpose.msra.mxu0 0
        %548 = vmatprep.subr.bf16.mxu0 0
        %549 = vmatpush1.bf16.xpose.msra.mxu0 0
        %550 = vmatprep.subr.bf16.mxu0 0
        %551 = vmatpush1.bf16.xpose.msra.mxu0 0
        %552 = vmatprep.subr.bf16.mxu0 0
        %553 = vmatpush1.bf16.xpose.msra.mxu0 0
        %554 = vmatprep.subr.bf16.mxu0 0
        %555 = vmatpush1.bf16.xpose.msra.mxu0 0
        %556 = vmatprep.subr.bf16.mxu0 0
        %557 = vmatpush1.bf16.xpose.msra.mxu0 0
        %558 = vmatprep.subr.bf16.mxu0 0
        %559 = vmatpush1.bf16.xpose.msra.mxu0 0
        %560 = vmatprep.subr.bf16.mxu0 0
        %561 = vmatpush1.bf16.xpose.msra.mxu0 0
        %562 = vmatprep.subr.bf16.mxu0 0
        %563 = vmatpush1.bf16.xpose.msra.mxu0 0
        %564 = vmatprep.subr.bf16.mxu0 0
        %565 = vmatpush1.bf16.xpose.msra.mxu0 0
        %566 = vmatprep.subr.bf16.mxu0 0
        %567 = vmatpush1.bf16.xpose.msra.mxu0 0
        %568 = vmatprep.subr.bf16.mxu0 0
        %569 = vmatpush1.bf16.xpose.msra.mxu0 0
        %570 = vmatprep.subr.bf16.mxu0 0
        %571 = vmatpush1.bf16.xpose.msra.mxu0 0
        %572 = vmatprep.subr.bf16.mxu0 0
        %573 = vmatpush1.bf16.xpose.msra.mxu0 0
        %574 = vmatprep.subr.bf16.mxu0 0
        %575 = vmatpush1.bf16.xpose.msra.mxu0 0
        %576 = vmatprep.mubr.bf16.mxu0 0
        %577 = vmatmul.mubr.bf16.gmra.mrb[0].mxu0 %v539
        %v578 = vpop.f32.mrb[0].mxu0
        %v579 = vadd.f32 0.0, %v578
        %v580 = vpop.f32.mrb[0].mxu0
        %v581 = vpop.f32.mrb[0].mxu0
        %v582 = vpop.f32.mrb[0].mxu0
        %583 = vdwg.mxu0
        %vm584 = vcmask 64512
        %v585 = vsel %vm584, %v441, -inf
        %586 = vmax.xlane.f32.xlu0 %v585
        %v587 = vpop.xlane.xlu0 %586
        %v588 = vsel %vm584, %v487, -inf
        %589 = vmax.xlane.f32.xlu0 %v588
        %v590 = vpop.xlane.xlu0 %589
        %v591 = vsel %vm584, %v533, -inf
        %592 = vmax.xlane.f32.xlu0 %v591
        %v593 = vpop.xlane.xlu0 %592
        %v594 = vsel %vm584, %v579, -inf
        %595 = vmax.xlane.f32.xlu0 %v594
        %v596 = vpop.xlane.xlu0 %595
        %vm597 = vcmp.eq.f32.partialorder %v441, %v587
        %vm598 = vcmp.eq.f32.partialorder %v487, %v590
        %vm599 = vcmp.eq.f32.partialorder %v533, %v593
        %vm600 = vcmp.eq.f32.partialorder %v579, %v596
        %v601 = vsel %vm597, 1.0, 0.0
        %v602 = vsel %vm598, 1.0, 0.0
        %v603 = vsel %vm599, 1.0, 0.0
        %v604 = vsel %vm600, 1.0, 0.0
        %v605 = vsel %vm584, %v601, 0.0
        %606 = vadd.xlane.f32.xlu0 %v605
        %v607 = vpop.xlane.xlu0 %606
        %v608 = vsel %vm584, %v602, 0.0
        %609 = vadd.xlane.f32.xlu0 %v608
        %v610 = vpop.xlane.xlu0 %609
        %v611 = vsel %vm584, %v603, 0.0
        %612 = vadd.xlane.f32.xlu0 %v611
        %v613 = vpop.xlane.xlu0 %612
        %v614 = vsel %vm584, %v604, 0.0
        %615 = vadd.xlane.f32.xlu0 %v614
        %v616 = vpop.xlane.xlu0 %615
        %vm617 = vcmp.gt.f32.partialorder 3.0, 0.0
        %vm618 = vcmp.le.f32.partialorder 3.0, %v607
        %vm619 = vcmp.le.f32.partialorder 3.0, %v610
        %vm620 = vcmp.le.f32.partialorder 3.0, %v613
        %vm621 = vcmp.le.f32.partialorder 3.0, %v616
        %vm622 = vmand %vm617, %vm618
        %vm623 = vmand %vm617, %vm619
        %vm624 = vmand %vm617, %vm620
        %vm625 = vmand %vm617, %vm621
        %v626 = vsel %vm622, %v587, -inf
        %v627 = vsel %vm623, %v590, -inf
        %v628 = vsel %vm624, %v593, -inf
        %v629 = vsel %vm625, %v596, -inf
        %v630 = vsub.f32 3.0, %v607
        %v631 = vsub.f32 3.0, %v610
        %v632 = vsub.f32 3.0, %v613
        %v633 = vsub.f32 3.0, %v616
        %v634 = vsel %vm597, -inf, %v441
        %v635 = vsel %vm598, -inf, %v487
        %v636 = vsel %vm599, -inf, %v533
        %v637 = vsel %vm600, -inf, %v579
        %v638 = vsel %vm584, %v634, -inf
        %639 = vmax.xlane.f32.xlu0 %v638
        %v640 = vpop.xlane.xlu0 %639
        %v641 = vsel %vm584, %v635, -inf
        %642 = vmax.xlane.f32.xlu0 %v641
        %v643 = vpop.xlane.xlu0 %642
        %v644 = vsel %vm584, %v636, -inf
        %645 = vmax.xlane.f32.xlu0 %v644
        %v646 = vpop.xlane.xlu0 %645
        %v647 = vsel %vm584, %v637, -inf
        %648 = vmax.xlane.f32.xlu0 %v647
        %v649 = vpop.xlane.xlu0 %648
        %vm650 = vcmp.eq.f32.partialorder %v634, %v640
        %vm651 = vcmp.eq.f32.partialorder %v635, %v643
        %vm652 = vcmp.eq.f32.partialorder %v636, %v646
        %vm653 = vcmp.eq.f32.partialorder %v637, %v649
        %v654 = vsel %vm650, 1.0, 0.0
        %v655 = vsel %vm651, 1.0, 0.0
        %v656 = vsel %vm652, 1.0, 0.0
        %v657 = vsel %vm653, 1.0, 0.0
        %v658 = vsel %vm584, %v654, 0.0
        %659 = vadd.xlane.f32.xlu0 %v658
        %v660 = vpop.xlane.xlu0 %659
        %v661 = vsel %vm584, %v655, 0.0
        %662 = vadd.xlane.f32.xlu0 %v661
        %v663 = vpop.xlane.xlu0 %662
        %v664 = vsel %vm584, %v656, 0.0
        %665 = vadd.xlane.f32.xlu0 %v664
        %v666 = vpop.xlane.xlu0 %665
        %v667 = vsel %vm584, %v657, 0.0
        %668 = vadd.xlane.f32.xlu0 %v667
        %v669 = vpop.xlane.xlu0 %668
        %vm670 = vcmp.gt.f32.partialorder %v630, 0.0
        %vm671 = vcmp.gt.f32.partialorder %v631, 0.0
        %vm672 = vcmp.gt.f32.partialorder %v632, 0.0
        %vm673 = vcmp.gt.f32.partialorder %v633, 0.0
        %vm674 = vcmp.le.f32.partialorder %v630, %v660
        %vm675 = vcmp.le.f32.partialorder %v631, %v663
        %vm676 = vcmp.le.f32.partialorder %v632, %v666
        %vm677 = vcmp.le.f32.partialorder %v633, %v669
        %vm678 = vmand %vm670, %vm674
        %vm679 = vmand %vm671, %vm675
        %vm680 = vmand %vm672, %vm676
        %vm681 = vmand %vm673, %vm677
        %v682 = vsel %vm678, %v640, %v626
        %v683 = vsel %vm679, %v643, %v627
        %v684 = vsel %vm680, %v646, %v628
        %v685 = vsel %vm681, %v649, %v629
        %v686 = vsub.f32 %v630, %v660
        %v687 = vsub.f32 %v631, %v663
        %v688 = vsub.f32 %v632, %v666
        %v689 = vsub.f32 %v633, %v669
        %v690 = vsel %vm650, -inf, %v634
        %v691 = vsel %vm651, -inf, %v635
        %v692 = vsel %vm652, -inf, %v636
        %v693 = vsel %vm653, -inf, %v637
        %v694 = vsel %vm584, %v690, -inf
        %695 = vmax.xlane.f32.xlu0 %v694
        %v696 = vpop.xlane.xlu0 %695
        %v697 = vsel %vm584, %v691, -inf
        %698 = vmax.xlane.f32.xlu0 %v697
        %v699 = vpop.xlane.xlu0 %698
        %v700 = vsel %vm584, %v692, -inf
        %701 = vmax.xlane.f32.xlu0 %v700
        %v702 = vpop.xlane.xlu0 %701
        %v703 = vsel %vm584, %v693, -inf
        %704 = vmax.xlane.f32.xlu0 %v703
        %v705 = vpop.xlane.xlu0 %704
        %vm706 = vcmp.eq.f32.partialorder %v690, %v696
        %vm707 = vcmp.eq.f32.partialorder %v691, %v699
        %vm708 = vcmp.eq.f32.partialorder %v692, %v702
        %vm709 = vcmp.eq.f32.partialorder %v693, %v705
        %v710 = vsel %vm706, 1.0, 0.0
        %v711 = vsel %vm707, 1.0, 0.0
        %v712 = vsel %vm708, 1.0, 0.0
        %v713 = vsel %vm709, 1.0, 0.0
        %v714 = vsel %vm584, %v710, 0.0
        %715 = vadd.xlane.f32.xlu0 %v714
        %v716 = vpop.xlane.xlu0 %715
        %v717 = vsel %vm584, %v711, 0.0
        %718 = vadd.xlane.f32.xlu0 %v717
        %v719 = vpop.xlane.xlu0 %718
        %v720 = vsel %vm584, %v712, 0.0
        %721 = vadd.xlane.f32.xlu0 %v720
        %v722 = vpop.xlane.xlu0 %721
        %v723 = vsel %vm584, %v713, 0.0
        %724 = vadd.xlane.f32.xlu0 %v723
        %v725 = vpop.xlane.xlu0 %724
        %vm726 = vcmp.gt.f32.partialorder %v686, 0.0
        %vm727 = vcmp.gt.f32.partialorder %v687, 0.0
        %vm728 = vcmp.gt.f32.partialorder %v688, 0.0
        %vm729 = vcmp.gt.f32.partialorder %v689, 0.0
        %vm730 = vcmp.le.f32.partialorder %v686, %v716
        %vm731 = vcmp.le.f32.partialorder %v687, %v719
        %vm732 = vcmp.le.f32.partialorder %v688, %v722
        %vm733 = vcmp.le.f32.partialorder %v689, %v725
        %vm734 = vmand %vm726, %vm730
        %vm735 = vmand %vm727, %vm731
        %vm736 = vmand %vm728, %vm732
        %vm737 = vmand %vm729, %vm733
        %v738 = vsel %vm734, %v696, %v682
        %v739 = vsel %vm735, %v699, %v683
        %v740 = vsel %vm736, %v702, %v684
        %v741 = vsel %vm737, %v705, %v685
        %vm742 = vcmp.lt.f32.partialorder %v441, %v738
        %vm743 = vcmp.lt.f32.partialorder %v487, %v739
        %vm744 = vcmp.lt.f32.partialorder %v533, %v740
        %vm745 = vcmp.lt.f32.partialorder %v579, %v741
        %v746 = vsel %vm742, -1e+18, %v441
        %v747 = vsel %vm743, -1e+18, %v487
        %v748 = vsel %vm744, -1e+18, %v533
        %v749 = vsel %vm745, -1e+18, %v579
        %v750 = vsub.f32 %v746, %v587
        %v751 = vsub.f32 %v747, %v590
        %v752 = vsub.f32 %v748, %v593
        %v753 = vsub.f32 %v749, %v596
        %v754 = vmul.f32 %v750, 1.442695
        %v755 = vpow.pop %v754
        %v756 = vmul.f32 %v751, 1.442695
        %v757 = vpow.pop %v756
        %v758 = vmul.f32 %v752, 1.442695
        %v759 = vpow.pop %v758
        %v760 = vmul.f32 %v753, 1.442695
        %v761 = vpow.pop %v760
        %v762 = vsel %vm584, %v755, 0.0
        %763 = vadd.xlane.f32.xlu0 %v762
        %v764 = vpop.xlane.xlu0 %763
        %v765 = vsel %vm584, %v757, 0.0
        %766 = vadd.xlane.f32.xlu0 %v765
        %v767 = vpop.xlane.xlu0 %766
        %v768 = vsel %vm584, %v759, 0.0
        %769 = vadd.xlane.f32.xlu0 %v768
        %v770 = vpop.xlane.xlu0 %769
        %v771 = vsel %vm584, %v761, 0.0
        %772 = vadd.xlane.f32.xlu0 %v771
        %v773 = vpop.xlane.xlu0 %772
        %v774 = vrcp.pop %v764
        %v775 = vrcp.pop %v767
        %v776 = vrcp.pop %v770
        %v777 = vrcp.pop %v773
        %v778 = vmul.f32 %v755, %v774
        %v779 = vmul.f32 %v757, %v775
        %v780 = vmul.f32 %v759, %v776
        %v781 = vmul.f32 %v761, %v777
        %v782 = vpack.c.bf16 %v778, %v778
        %v783 = vpack.c.bf16 %v779, %v779
        %v784 = vpack.c.bf16 %v780, %v780
        %v785 = vpack.c.bf16 %v781, %v781
        %v786 = vld [vmem:[%s312] sm:$0xff]
        %v787 = vld [vmem:[%s312 + $0x8] sm:$0xff]
        %v788 = vld [vmem:[%s312 + $0x10] sm:$0xff]
        %v789 = vld [vmem:[%s312 + $0x18] sm:$0xff]
        %v790 = vpack.c.bf16 %v786, %v786
        %v791 = vpack.c.bf16 %v787, %v787
        %v792 = vpack.c.bf16 %v788, %v788
        %v793 = vpack.c.bf16 %v789, %v789
        %v795 = vsel %vm584, %v782, 0
        %vm797 = vcmask 1043456
        %v799 = vsel %vm797, %v790, 0
        %801 = vmatprep.subr.bf16.mxu0 0
        %802 = vmatpush1.bf16.msra.mxu0 %v799
        %803 = vmatprep.subr.bf16.mxu0 0
        %804 = vmatpush1.bf16.msra.mxu0 0
        %805 = vmatprep.subr.bf16.mxu0 0
        %806 = vmatpush1.bf16.msra.mxu0 0
        %807 = vmatprep.subr.bf16.mxu0 0
        %808 = vmatpush1.bf16.msra.mxu0 0
        %809 = vmatprep.subr.bf16.mxu0 0
        %810 = vmatpush1.bf16.msra.mxu0 0
        %811 = vmatprep.subr.bf16.mxu0 0
        %812 = vmatpush1.bf16.msra.mxu0 0
        %813 = vmatprep.subr.bf16.mxu0 0
        %814 = vmatpush1.bf16.msra.mxu0 0
        %815 = vmatprep.subr.bf16.mxu0 0
        %816 = vmatpush1.bf16.msra.mxu0 0
        %817 = vmatprep.subr.bf16.mxu0 0
        %818 = vmatpush1.bf16.msra.mxu0 0
        %819 = vmatprep.subr.bf16.mxu0 0
        %820 = vmatpush1.bf16.msra.mxu0 0
        %821 = vmatprep.subr.bf16.mxu0 0
        %822 = vmatpush1.bf16.msra.mxu0 0
        %823 = vmatprep.subr.bf16.mxu0 0
        %824 = vmatpush1.bf16.msra.mxu0 0
        %825 = vmatprep.subr.bf16.mxu0 0
        %826 = vmatpush1.bf16.msra.mxu0 0
        %827 = vmatprep.subr.bf16.mxu0 0
        %828 = vmatpush1.bf16.msra.mxu0 0
        %829 = vmatprep.subr.bf16.mxu0 0
        %830 = vmatpush1.bf16.msra.mxu0 0
        %831 = vmatprep.subr.bf16.mxu0 0
        %832 = vmatpush1.bf16.msra.mxu0 0
        %833 = vmatprep.mubr.bf16.mxu0 0
        %834 = vmatmul.mubr.bf16.gmra.mrb[0].mxu0 %v795
        %v835 = vpop.f32.mrb[0].mxu0
        %v836 = vadd.f32 0.0, %v835
        %v837 = vpop.f32.mrb[0].mxu0
        %v838 = vpop.f32.mrb[0].mxu0
        %v839 = vpop.f32.mrb[0].mxu0
        %840 = vdwg.mxu0
        %v842 = vsel %vm584, %v783, 0
        %v845 = vsel %vm797, %v791, 0
        %847 = vmatprep.subr.bf16.mxu0 0
        %848 = vmatpush1.bf16.msra.mxu0 %v845
        %849 = vmatprep.subr.bf16.mxu0 0
        %850 = vmatpush1.bf16.msra.mxu0 0
        %851 = vmatprep.subr.bf16.mxu0 0
        %852 = vmatpush1.bf16.msra.mxu0 0
        %853 = vmatprep.subr.bf16.mxu0 0
        %854 = vmatpush1.bf16.msra.mxu0 0
        %855 = vmatprep.subr.bf16.mxu0 0
        %856 = vmatpush1.bf16.msra.mxu0 0
        %857 = vmatprep.subr.bf16.mxu0 0
        %858 = vmatpush1.bf16.msra.mxu0 0
        %859 = vmatprep.subr.bf16.mxu0 0
        %860 = vmatpush1.bf16.msra.mxu0 0
        %861 = vmatprep.subr.bf16.mxu0 0
        %862 = vmatpush1.bf16.msra.mxu0 0
        %863 = vmatprep.subr.bf16.mxu0 0
        %864 = vmatpush1.bf16.msra.mxu0 0
        %865 = vmatprep.subr.bf16.mxu0 0
        %866 = vmatpush1.bf16.msra.mxu0 0
        %867 = vmatprep.subr.bf16.mxu0 0
        %868 = vmatpush1.bf16.msra.mxu0 0
        %869 = vmatprep.subr.bf16.mxu0 0
        %870 = vmatpush1.bf16.msra.mxu0 0
        %871 = vmatprep.subr.bf16.mxu0 0
        %872 = vmatpush1.bf16.msra.mxu0 0
        %873 = vmatprep.subr.bf16.mxu0 0
        %874 = vmatpush1.bf16.msra.mxu0 0
        %875 = vmatprep.subr.bf16.mxu0 0
        %876 = vmatpush1.bf16.msra.mxu0 0
        %877 = vmatprep.subr.bf16.mxu0 0
        %878 = vmatpush1.bf16.msra.mxu0 0
        %879 = vmatprep.mubr.bf16.mxu0 0
        %880 = vmatmul.mubr.bf16.gmra.mrb[0].mxu0 %v842
        %v881 = vpop.f32.mrb[0].mxu0
        %v882 = vadd.f32 0.0, %v881
        %v883 = vpop.f32.mrb[0].mxu0
        %v884 = vpop.f32.mrb[0].mxu0
        %v885 = vpop.f32.mrb[0].mxu0
        %886 = vdwg.mxu0
        %v888 = vsel %vm584, %v784, 0
        %v891 = vsel %vm797, %v792, 0
        %893 = vmatprep.subr.bf16.mxu0 0
        %894 = vmatpush1.bf16.msra.mxu0 %v891
        %895 = vmatprep.subr.bf16.mxu0 0
        %896 = vmatpush1.bf16.msra.mxu0 0
        %897 = vmatprep.subr.bf16.mxu0 0
        %898 = vmatpush1.bf16.msra.mxu0 0
        %899 = vmatprep.subr.bf16.mxu0 0
        %900 = vmatpush1.bf16.msra.mxu0 0
        %901 = vmatprep.subr.bf16.mxu0 0
        %902 = vmatpush1.bf16.msra.mxu0 0
        %903 = vmatprep.subr.bf16.mxu0 0
        %904 = vmatpush1.bf16.msra.mxu0 0
        %905 = vmatprep.subr.bf16.mxu0 0
        %906 = vmatpush1.bf16.msra.mxu0 0
        %907 = vmatprep.subr.bf16.mxu0 0
        %908 = vmatpush1.bf16.msra.mxu0 0
        %909 = vmatprep.subr.bf16.mxu0 0
        %910 = vmatpush1.bf16.msra.mxu0 0
        %911 = vmatprep.subr.bf16.mxu0 0
        %912 = vmatpush1.bf16.msra.mxu0 0
        %913 = vmatprep.subr.bf16.mxu0 0
        %914 = vmatpush1.bf16.msra.mxu0 0
        %915 = vmatprep.subr.bf16.mxu0 0
        %916 = vmatpush1.bf16.msra.mxu0 0
        %917 = vmatprep.subr.bf16.mxu0 0
        %918 = vmatpush1.bf16.msra.mxu0 0
        %919 = vmatprep.subr.bf16.mxu0 0
        %920 = vmatpush1.bf16.msra.mxu0 0
        %921 = vmatprep.subr.bf16.mxu0 0
        %922 = vmatpush1.bf16.msra.mxu0 0
        %923 = vmatprep.subr.bf16.mxu0 0
        %924 = vmatpush1.bf16.msra.mxu0 0
        %925 = vmatprep.mubr.bf16.mxu0 0
        %926 = vmatmul.mubr.bf16.gmra.mrb[0].mxu0 %v888
        %v927 = vpop.f32.mrb[0].mxu0
        %v928 = vadd.f32 0.0, %v927
        %v929 = vpop.f32.mrb[0].mxu0
        %v930 = vpop.f32.mrb[0].mxu0
        %v931 = vpop.f32.mrb[0].mxu0
        %932 = vdwg.mxu0
        %v934 = vsel %vm584, %v785, 0
        %v937 = vsel %vm797, %v793, 0
        %939 = vmatprep.subr.bf16.mxu0 0
        %940 = vmatpush1.bf16.msra.mxu0 %v937
        %941 = vmatprep.subr.bf16.mxu0 0
        %942 = vmatpush1.bf16.msra.mxu0 0
        %943 = vmatprep.subr.bf16.mxu0 0
        %944 = vmatpush1.bf16.msra.mxu0 0
        %945 = vmatprep.subr.bf16.mxu0 0
        %946 = vmatpush1.bf16.msra.mxu0 0
        %947 = vmatprep.subr.bf16.mxu0 0
        %948 = vmatpush1.bf16.msra.mxu0 0
        %949 = vmatprep.subr.bf16.mxu0 0
        %950 = vmatpush1.bf16.msra.mxu0 0
        %951 = vmatprep.subr.bf16.mxu0 0
        %952 = vmatpush1.bf16.msra.mxu0 0
        %953 = vmatprep.subr.bf16.mxu0 0
        %954 = vmatpush1.bf16.msra.mxu0 0
        %955 = vmatprep.subr.bf16.mxu0 0
        %956 = vmatpush1.bf16.msra.mxu0 0
        %957 = vmatprep.subr.bf16.mxu0 0
        %958 = vmatpush1.bf16.msra.mxu0 0
        %959 = vmatprep.subr.bf16.mxu0 0
        %960 = vmatpush1.bf16.msra.mxu0 0
        %961 = vmatprep.subr.bf16.mxu0 0
        %962 = vmatpush1.bf16.msra.mxu0 0
        %963 = vmatprep.subr.bf16.mxu0 0
        %964 = vmatpush1.bf16.msra.mxu0 0
        %965 = vmatprep.subr.bf16.mxu0 0
        %966 = vmatpush1.bf16.msra.mxu0 0
        %967 = vmatprep.subr.bf16.mxu0 0
        %968 = vmatpush1.bf16.msra.mxu0 0
        %969 = vmatprep.subr.bf16.mxu0 0
        %970 = vmatpush1.bf16.msra.mxu0 0
        %971 = vmatprep.mubr.bf16.mxu0 0
        %972 = vmatmul.mubr.bf16.gmra.mrb[0].mxu0 %v934
        %v973 = vpop.f32.mrb[0].mxu0
        %v974 = vadd.f32 0.0, %v973
        %v975 = vpop.f32.mrb[0].mxu0
        %v976 = vpop.f32.mrb[0].mxu0
        %v977 = vpop.f32.mrb[0].mxu0
        %978 = vdwg.mxu0
        %979 = vst.msk [vmem:[%s344] sm:$0xff] %vm399, %v836
        %980 = vst.msk [vmem:[%s344 + $0x8] sm:$0xff] %vm399, %v882
        %981 = vst.msk [vmem:[%s344 + $0x10] sm:$0xff] %vm399, %v928
        %982 = vst.msk [vmem:[%s344 + $0x18] sm:$0xff] %vm399, %v974
        %983 = vst.msk [vmem:[%s351] sm:$0xff] %vm584, %v778
        %984 = vst.msk [vmem:[%s351 + $0x8] sm:$0xff] %vm584, %v779
        %985 = vst.msk [vmem:[%s351 + $0x10] sm:$0xff] %vm584, %v780
        %986 = vst.msk [vmem:[%s351 + $0x18] sm:$0xff] %vm584, %v781
        %vm987 = vmpackc.low %vm742, %vm742
        %vm988 = vmpackc.even %vm987, %vm987
        %vm989 = vmpackc.low %vm743, %vm743
        %vm990 = vmpackc.even %vm989, %vm989
        %vm991 = vmpackc.low %vm744, %vm744
        %vm992 = vmpackc.even %vm991, %vm991
        %vm993 = vmpackc.low %vm745, %vm745
        %vm994 = vmpackc.even %vm993, %vm993
        %v995 = vsel %vm988, 16843009, 0
        %v996 = vsel %vm990, 16843009, 0
        %v997 = vsel %vm992, 16843009, 0
        %v998 = vsel %vm994, 16843009, 0
        %vm999 = vcmask 58368
        %1000 = vst.msk [vmem:[%s374] sm:$0x3] %vm999, %v995
        %1001 = vst.msk [vmem:[%s374 + $0x2] sm:$0x3] %vm999, %v996
        %1002 = vst.msk [vmem:[%s374 + $0x4] sm:$0x3] %vm999, %v997
        %1003 = vst.msk [vmem:[%s374 + $0x6] sm:$0x3] %vm999, %v998
        %s1004 = sand.u32 %s131, 1
        %s1005 = scalar_lea.sflag [#allocation4], %s1004
        %s1006 = sand.u32 %s131, 1
        %s1007 = smul.addr %s1006, 32
        %s1008 = scalar_lea.vmem [#allocation8], %s1007
        %s1009 = sand.u32 %s159, 1
        %s1010 = scalar_lea.sflag [#allocation10], %s1009
        %s1011 = sand.u32 %s159, 1
        %s1012 = smul.addr %s1011, 32
        %s1013 = scalar_lea.vmem [#allocation9], %s1012
        %s1014 = smul.u32 4, %s33
        %p1015 = scmp.lt.s32.totalorder %s1014, 7
        %s1016 = scalar_select %p1015, %s1014, 7
        %p1017 = scmp.lt.s32.totalorder %s34, 0
        %s1018 = scalar_select %p1017, %s34, 0
        %s1019 = sadd.s32 %s1018, %s1016
        %s1020 = smul.addr %s1019, 2
        %s1021 = scalar_lea.vmem %s5, %s1020
        // Predicated region
        $region45: #{a_call__.1} parent=31 // pred_check
          %p1022 = pneg %p141
        $region46: #{a_call__.1} parent=31 // pred_check_branch
          %1024 = sbr.rel (%p1022) target = $region48
        $region47: #{a_call__.1} parent=31 // pred_region
          %s1025 = smul.u32 4, %s33
          %s1027 = ssub.s32 512, 512
          %1028 = vsyncadd %s1005, %s1027
          %s1029 = sadd.s32 %s34, %s1025
          %s1030 = smul.addr %s1029, 128
          %s1031 = scalar_lea.hbm %s3, %s1030
          %s1032 = sshll.u32 %s1008, 4
          %s1033 = int_to_ptr.vmem [resolvable:$true] %s1032
          %1038 = dma.vmem_to_hbm [thread:$0]  %s1033, 512, %s1031, %s1005, 128, 128, 8
        $region48: #{a_call__.1} parent=31 // pred_fallthru
          _
        // Predicated region
        $region49: #{a_call__.1} parent=31 // pred_check
          %p1039 = pneg %p169
        $region50: #{a_call__.1} parent=31 // pred_check_branch
          %1041 = sbr.rel (%p1039) target = $region52
        $region51: #{a_call__.1} parent=31 // pred_region
          %s1042 = smul.u32 4, %s33
          %s1044 = ssub.s32 512, 512
          %1045 = vsyncadd %s1010, %s1044
          %s1046 = sadd.s32 %s34, %s1042
          %s1047 = smul.addr %s1046, 128
          %s1048 = scalar_lea.hbm %s4, %s1047
          %s1049 = sshll.u32 %s1013, 4
          %s1050 = int_to_ptr.vmem [resolvable:$true] %s1049
          %1055 = dma.vmem_to_hbm [thread:$0]  %s1050, 512, %s1048, %s1010, 128, 128, 8
        $region52: #{a_call__.1} parent=31 // pred_fallthru
          _
        // Predicated region
        $region53: #{a_call__.1} parent=31 // pred_check
          %p1056 = pneg %p197
        $region54: #{a_call__.1} parent=31 // pred_check_branch
          %1058 = sbr.rel (%p1056) target = $region56
        $region55: #{a_call__.1} parent=31 // pred_region
          %s1059 = smul.u32 4, %s33
        $region56: #{a_call__.1} parent=31 // pred_fallthru
          _
      $region32: #{a_call__.1} parent=5 // pred_fallthru
        _
      %p1060 = scmp.le.s32.totalorder 2, %s24
      // Predicated region
      $region57: #{a_call__.1} parent=5 // pred_check
        %p1061 = pneg %p1060
      $region58: #{a_call__.1} parent=5 // pred_check_branch
        %1063 = sbr.rel (%p1061) target = $region60
      $region59: #{a_call__.1} parent=5 // pred_region
        %s1064 = ssub.s32 %s24, 2
        // Predicated region
        $region61: #{a_call__.1} parent=59 // pred_check
          %p1065 = pneg %p147
        $region62: #{a_call__.1} parent=59 // pred_check_branch
          %1067 = sbr.rel (%p1065) target = $region64
        $region63: #{a_call__.1} parent=59 // pred_region
          %s1068 = sand.u32 %s132, 1
          %s1069 = scalar_lea.sflag [#allocation4], %s1068
          %s1070 = sand.u32 %s132, 1
          %s1071 = smul.addr %s1070, 32
          %s1072 = scalar_lea.vmem [#allocation8], %s1071
          %1073 = dma.done %s1069, 512
        $region64: #{a_call__.1} parent=59 // pred_fallthru
          _
        // Predicated region
        $region65: #{a_call__.1} parent=59 // pred_check
          %p1074 = pneg %p175
        $region66: #{a_call__.1} parent=59 // pred_check_branch
          %1076 = sbr.rel (%p1074) target = $region68
        $region67: #{a_call__.1} parent=59 // pred_region
          %s1077 = sand.u32 %s160, 1
          %s1078 = scalar_lea.sflag [#allocation10], %s1077
          %s1079 = sand.u32 %s160, 1
          %s1080 = smul.addr %s1079, 32
          %s1081 = scalar_lea.vmem [#allocation9], %s1080
          %1082 = dma.done %s1078, 512
        $region68: #{a_call__.1} parent=59 // pred_fallthru
          _
        // Predicated region
        $region69: #{a_call__.1} parent=59 // pred_check
          %p1083 = pneg %p203
        $region70: #{a_call__.1} parent=59 // pred_check_branch
          %1085 = sbr.rel (%p1083) target = $region72
        $region71: #{a_call__.1} parent=59 // pred_region
          %s1086 = smul.u32 4, %s35
          %p1087 = scmp.lt.s32.totalorder %s1086, 7
          %s1088 = scalar_select %p1087, %s1086, 7
          %p1089 = scmp.lt.s32.totalorder %s36, 0
          %s1090 = scalar_select %p1089, %s36, 0
          %s1091 = sadd.s32 %s1090, %s1088
          %s1092 = smul.addr %s1091, 2
          %s1093 = scalar_lea.vmem %s5, %s1092
        $region72: #{a_call__.1} parent=59 // pred_fallthru
          _
      $region60: #{a_call__.1} parent=5 // pred_fallthru
        _
    $region6: #{a_call__.1} parent=1 // loop_footer
      %s28 = sadd.s32 1, %s24
    $region7: #{a_call__.1} parent=1 // loop_footer_branch
      %23 = sbr.rel target = $region3
    $region8: #{a_call__.1} parent=1 // loop_exit
      _
    %1094 = vsyncpa [#allocation3], 1
    %s1095 = scalar_lea.sflag [#allocation3], 1
    %1096 = vsyncpa %s1095, 1
    %1097 = vsyncpa [#allocation6], 1
    %s1098 = scalar_lea.sflag [#allocation6], 1
    %1099 = vsyncpa %s1098, 1
    %1100 = vsyncpa [#allocation4], 1
    %s1101 = scalar_lea.sflag [#allocation4], 1
    %1102 = vsyncpa %s1101, 1
    %1103 = vsyncpa [#allocation10], 1
    %s1104 = scalar_lea.sflag [#allocation10], 1
    %1105 = vsyncpa %s1104, 1

</llo_original>
